<compile_context>
chip_gen: v6e
topology: v6e:2x2x1
jax: 0.10.0
libtpu: 0.0.40
codegen_flags: <defaults>
</compile_context>

<pallas_src>
import jax
import jax.numpy as jnp
from jax import lax
from jax.experimental import pallas as pl
from jax.experimental.pallas import tpu as pltpu

BATCH = 2
SEQ = 8
D_MODEL = 32
D_FF = 4 * D_MODEL          # nn default (d_ff or 4*d_model) -> 128
EPS = 1e-5                  # nn.LayerNorm default
LANE = 128                  # TPU lane-tile width


def _layernorm(x, gamma, beta):
    mean = jnp.mean(x, axis=-1, keepdims=True)
    xc = x - mean
    var = jnp.mean(xc * xc, axis=-1, keepdims=True)
    return xc * lax.rsqrt(var + EPS) * gamma + beta


# ----------------------------------------------------------------------------
# Fused kernel + wrapper: single pallas_call, no grid (one invocation, one TC).
# ----------------------------------------------------------------------------
def group_encoder_layer(x, w_slab, vec_slab, *, d_ff=D_FF):
    """x: (B, L, D) f32.  w_slab: (D, 4*128) bf16.  vec_slab: (8, 128) f32."""
    B, L, D = x.shape
    DFF = d_ff
    M = B * L

    def kernel(x_ref, w_ref, vec_ref, out_ref):
        x_all = x_ref[...]                                   # (M, D) f32
        vec = vec_ref[...]                                   # (8, 128) f32

        # ---- tile-aligned ref slices of the packed bf16 weight slab ---------
        wqkv = w_ref[:, 0:3 * D]                             # (D, 3D)  lanes [0, 96)
        wo = w_ref[:, LANE:LANE + D]                         # (D, D)   tile 1
        w1 = w_ref[:, 2 * LANE:2 * LANE + DFF]               # (D, DFF) tile 2
        w2t = w_ref[:, 3 * LANE:3 * LANE + DFF]              # (D, DFF) tile 3 (= w2.T)

        # ---- bias / LayerNorm parameter rows (hoisted once, f32) ------------
        b_qkv = vec[0:1, 0:3 * D]                            # bq already scaled
        b_o = vec[1:2, 0:D]
        b_1 = vec[2:3, 0:DFF]
        b_2 = vec[3:4, 0:D]
        g1, be1 = vec[4:5, 0:D], vec[5:6, 0:D]
        g2, be2 = vec[6:7, 0:D], vec[7:8, 0:D]

        # ---- fused QKV projection over all B*L rows (bf16 MXU, f32 acc) -----
        xb = x_all.astype(jnp.bfloat16)
        qkv = jnp.dot(xb, wqkv, preferred_element_type=jnp.float32) + b_qkv
        q = qkv[:, 0:D]
        k = qkv[:, D:2 * D]
        v = qkv[:, 2 * D:3 * D]

        # ---- attention cores: static unroll over batch (sublane-aligned) ----
        attn_rows = []
        for b in range(B):
            rows = slice(b * L, (b + 1) * L)
            qb = q[rows].astype(jnp.bfloat16)                # (L, D)
            kb = k[rows].astype(jnp.bfloat16)
            vb = v[rows].astype(jnp.bfloat16)
            # q @ k^T without materializing a transpose (contract last dims)
            s = lax.dot_general(qb, kb, (((1,), (1,)), ((), ())),
                                preferred_element_type=jnp.float32)   # (L, L) f32
            s = s - jnp.max(s, axis=-1, keepdims=True)
            p = jnp.exp(s)
            p = p / jnp.sum(p, axis=-1, keepdims=True)       # exact softmax denom
            attn_rows.append(
                jnp.dot(p.astype(jnp.bfloat16), vb,
                        preferred_element_type=jnp.float32))           # (L, D)
        attn = jnp.concatenate(attn_rows, axis=0)                      # (M, D)

        new_x = jnp.dot(attn.astype(jnp.bfloat16), wo,
                        preferred_element_type=jnp.float32) + b_o

        # ---- x = x + dropout(new_x);  y = x = norm1(x)  (dropout = identity)
        x1 = _layernorm(x_all + new_x, g1, be1)

        # ---- FFN: relu(proj1) -> proj2 (w2 stored transposed, lane-dense) ---
        h = jnp.maximum(
            jnp.dot(x1.astype(jnp.bfloat16), w1,
                    preferred_element_type=jnp.float32) + b_1, 0.0)
        y = lax.dot_general(h.astype(jnp.bfloat16), w2t, (((1,), (1,)), ((), ())),
                            preferred_element_type=jnp.float32) + b_2

        # ---- out = norm2(x + y) ----------------------------------------------
        out_ref[...] = _layernorm(x1 + y, g2, be2)

    vmem = pl.BlockSpec(memory_space=pltpu.MemorySpace.VMEM)
    out_flat = pl.pallas_call(
        kernel,
        in_specs=[vmem, vmem, vmem],
        out_specs=vmem,
        out_shape=jax.ShapeDtypeStruct((M, D), jnp.float32),
    )(x.reshape(M, D), w_slab, vec_slab)
    # TODO(synk): at realistic B*L / D, present a >=128-lane-wide output slab to avoid
    # masked stores; at (16, 32) the absolute cost is negligible.
    return out_flat.reshape(B, L, D)


# ----------------------------------------------------------------------------
# Deterministic parameter init + packing into lane-dense, tile-aligned slabs.
# ----------------------------------------------------------------------------
def init_params(key, d_model, d_ff):
    ks = jax.random.split(key, 12)
    sd = 1.0 / jnp.sqrt(jnp.float32(d_model))
    sf = 1.0 / jnp.sqrt(jnp.float32(d_ff))

    def bf16_repr(w):
        # Snap example weights to the bf16 grid so the f32 reference and the
        # bf16-MXU kernel use identical effective weights.
        return w.astype(jnp.bfloat16).astype(jnp.float32)

    return {
        "wq": bf16_repr(jax.random.normal(ks[0], (d_model, d_model), jnp.float32) * sd),
        "wk": bf16_repr(jax.random.normal(ks[1], (d_model, d_model), jnp.float32) * sd),
        "wv": bf16_repr(jax.random.normal(ks[2], (d_model, d_model), jnp.float32) * sd),
        "wo": bf16_repr(jax.random.normal(ks[3], (d_model, d_model), jnp.float32) * sd),
        "w1": bf16_repr(jax.random.normal(ks[4], (d_model, d_ff), jnp.float32) * sd),
        "w2": bf16_repr(jax.random.normal(ks[5], (d_ff, d_model), jnp.float32) * sf),
        "bq": jax.random.normal(ks[6], (d_model,), jnp.float32) * 0.02,
        "bk": jax.random.normal(ks[7], (d_model,), jnp.float32) * 0.02,
        "bv": jax.random.normal(ks[8], (d_model,), jnp.float32) * 0.02,
        "bo": jax.random.normal(ks[9], (d_model,), jnp.float32) * 0.02,
        "b1": jax.random.normal(ks[10], (d_ff,), jnp.float32) * 0.02,
        "b2": jax.random.normal(ks[11], (d_model,), jnp.float32) * 0.02,
        # nn.LayerNorm init: weight=1, bias=0
        "g1": jnp.ones((d_model,), jnp.float32),
        "be1": jnp.zeros((d_model,), jnp.float32),
        "g2": jnp.ones((d_model,), jnp.float32),
        "be2": jnp.zeros((d_model,), jnp.float32),
    }


def pack_params(p, d_model, d_ff):
    D, DFF = d_model, d_ff
    # Packing assumes each segment fits one 128-lane tile (holds for defaults).
    assert 3 * D <= LANE and DFF <= LANE, "slab packing needs 3*d_model<=128 and d_ff<=128"
    scale = 1.0 / jnp.sqrt(jnp.float32(D))

    def tile(w):                                 # pad columns up to one lane tile
        return jnp.pad(w, ((0, 0), (0, LANE - w.shape[1])))

    # bf16 weight slab (D, 4*128): each segment starts on a 128-lane boundary.
    #   tile 0: [wq*scale | wk | wv | pad]   tile 1: [wo | pad]
    #   tile 2: [w1]                         tile 3: [w2^T]
    wqkv = jnp.concatenate([p["wq"] * scale, p["wk"], p["wv"]], axis=1)     # (D, 3D)
    w_slab = jnp.concatenate(
        [tile(wqkv), tile(p["wo"]), tile(p["w1"]), tile(p["w2"].T)], axis=1
    ).astype(jnp.bfloat16)                                                  # (D, 512)

    # f32 bias / LayerNorm-parameter slab (8, 128)
    def row(v):
        return jnp.pad(v, (0, LANE - v.shape[0]))[None, :]

    b_qkv = jnp.concatenate([p["bq"] * scale, p["bk"], p["bv"]], axis=0)    # (3D,)
    vec_slab = jnp.concatenate(
        [row(b_qkv), row(p["bo"]), row(p["b1"]), row(p["b2"]),
         row(p["g1"]), row(p["be1"]), row(p["g2"]), row(p["be2"])], axis=0) # (8, 128)

    return w_slab, vec_slab


# ----------------------------------------------------------------------------
# Pure-JAX f32 reference (mirrors the PyTorch forward, inference mode).
# ----------------------------------------------------------------------------
def reference(x, p):
    scale = 1.0 / jnp.sqrt(jnp.float32(x.shape[-1]))
    q = x @ p["wq"] + p["bq"]
    k = x @ p["wk"] + p["bk"]
    v = x @ p["wv"] + p["bv"]
    s = jnp.einsum("bld,bmd->blm", q, k) * scale
    a = jax.nn.softmax(s, axis=-1)
    new_x = jnp.einsum("blm,bmd->bld", a, v) @ p["wo"] + p["bo"]

    def ln(t, g, b):
        mu = t.mean(-1, keepdims=True)
        var = ((t - mu) ** 2).mean(-1, keepdims=True)
        return (t - mu) / jnp.sqrt(var + EPS) * g + b

    x1 = ln(x + new_x, p["g1"], p["be1"])
    h = jnp.maximum(x1 @ p["w1"] + p["b1"], 0.0)
    y = h @ p["w2"] + p["b2"]
    return ln(x1 + y, p["g2"], p["be2"])


if __name__ == "__main__":
    root = jax.random.PRNGKey(0)
    k_x, k_p = jax.random.split(root)

    x = jax.random.normal(k_x, (BATCH, SEQ, D_MODEL), jnp.float32)
    params = init_params(k_p, D_MODEL, D_FF)
    w_slab, vec_slab = pack_params(params, D_MODEL, D_FF)

    fwd = jax.jit(group_encoder_layer)
    out = fwd(x, w_slab, vec_slab)
    jax.block_until_ready(out)

    # TODO(synk): dropout (train mode) and the layer_norm=False BatchNorm2d branch
    # are not implemented (inference-mode LayerNorm path only).
    ref = reference(x, params)
    assert out.shape == (BATCH, SEQ, D_MODEL)
    assert jnp.all(jnp.isfinite(out))
    # 2e-2 tolerance absorbs bf16 MXU operand rounding (weights are bf16-exact,
    # activations are rounded to bf16 at each matmul; accumulation is f32).
    assert jnp.allclose(out, ref, atol=2e-2, rtol=2e-2), \
        float(jnp.max(jnp.abs(out - ref)))
    print("KERNEL_OK")
</pallas_src>

<mosaic_0001>
module attributes {stable_mosaic.version = 11 : i64} {
  func.func @kernel(%arg0: memref<16x32xf32, #tpu.memory_space<vmem>>, %arg1: memref<32x512xbf16, #tpu.memory_space<vmem>>, %arg2: memref<8x128xf32, #tpu.memory_space<vmem>>, %arg3: memref<16x32xf32, #tpu.memory_space<vmem>>) attributes {dimension_semantics = [], scalar_prefetch = 0 : i64, scratch_operands = 0 : i64, tpu.core_type = #tpu.core_type<tc>} {
    %c0 = arith.constant 0 : index
    %c0_0 = arith.constant 0 : index
    %0 = vector.load %arg0[%c0, %c0_0] : memref<16x32xf32, #tpu.memory_space<vmem>>, vector<16x32xf32>
    %c0_1 = arith.constant 0 : index
    %c0_2 = arith.constant 0 : index
    %1 = vector.load %arg2[%c0_1, %c0_2] : memref<8x128xf32, #tpu.memory_space<vmem>>, vector<8x128xf32>
    %c0_3 = arith.constant 0 : index
    %c0_4 = arith.constant 0 : index
    %2 = vector.load %arg1[%c0_3, %c0_4] : memref<32x512xbf16, #tpu.memory_space<vmem>>, vector<32x96xbf16>
    %c0_5 = arith.constant 0 : index
    %c128 = arith.constant 128 : index
    %3 = vector.load %arg1[%c0_5, %c128] : memref<32x512xbf16, #tpu.memory_space<vmem>>, vector<32x32xbf16>
    %c0_6 = arith.constant 0 : index
    %c256 = arith.constant 256 : index
    %4 = vector.load %arg1[%c0_6, %c256] : memref<32x512xbf16, #tpu.memory_space<vmem>>, vector<32x128xbf16>
    %c0_7 = arith.constant 0 : index
    %c384 = arith.constant 384 : index
    %5 = vector.load %arg1[%c0_7, %c384] : memref<32x512xbf16, #tpu.memory_space<vmem>>, vector<32x128xbf16>
    %6 = vector.extract_strided_slice %1 {offsets = [0, 0], sizes = [1, 96], strides = [1, 1]} : vector<8x128xf32> to vector<1x96xf32>
    %7 = vector.extract_strided_slice %1 {offsets = [1, 0], sizes = [1, 32], strides = [1, 1]} : vector<8x128xf32> to vector<1x32xf32>
    %8 = vector.extract_strided_slice %1 {offsets = [2, 0], sizes = [1, 128], strides = [1, 1]} : vector<8x128xf32> to vector<1x128xf32>
    %9 = vector.extract_strided_slice %1 {offsets = [3, 0], sizes = [1, 32], strides = [1, 1]} : vector<8x128xf32> to vector<1x32xf32>
    %10 = vector.extract_strided_slice %1 {offsets = [4, 0], sizes = [1, 32], strides = [1, 1]} : vector<8x128xf32> to vector<1x32xf32>
    %11 = vector.extract_strided_slice %1 {offsets = [5, 0], sizes = [1, 32], strides = [1, 1]} : vector<8x128xf32> to vector<1x32xf32>
    %12 = vector.extract_strided_slice %1 {offsets = [6, 0], sizes = [1, 32], strides = [1, 1]} : vector<8x128xf32> to vector<1x32xf32>
    %13 = vector.extract_strided_slice %1 {offsets = [7, 0], sizes = [1, 32], strides = [1, 1]} : vector<8x128xf32> to vector<1x32xf32>
    %14 = arith.truncf %0 : vector<16x32xf32> to vector<16x32xbf16>
    %cst = arith.constant dense<0.000000e+00> : vector<16x96xf32>
    %15 = tpu.matmul %14, %2, %cst {dimension_numbers = #tpu.dot_dimension_numbers<[1], [0], [0], [1], [0, 0, 1, 1], [], []>} : vector<16x32xbf16>, vector<32x96xbf16>, vector<16x96xf32> -> vector<16x96xf32>
    %16 = vector.broadcast %6 : vector<1x96xf32> to vector<16x96xf32>
    %17 = arith.addf %15, %16 : vector<16x96xf32>
    %18 = vector.extract_strided_slice %17 {offsets = [0, 0], sizes = [16, 32], strides = [1, 1]} : vector<16x96xf32> to vector<16x32xf32>
    %19 = vector.extract_strided_slice %17 {offsets = [0, 32], sizes = [16, 32], strides = [1, 1]} : vector<16x96xf32> to vector<16x32xf32>
    %20 = vector.extract_strided_slice %17 {offsets = [0, 64], sizes = [16, 32], strides = [1, 1]} : vector<16x96xf32> to vector<16x32xf32>
    %21 = vector.extract_strided_slice %18 {offsets = [0, 0], sizes = [8, 32], strides = [1, 1]} : vector<16x32xf32> to vector<8x32xf32>
    %22 = arith.truncf %21 : vector<8x32xf32> to vector<8x32xbf16>
    %23 = vector.extract_strided_slice %19 {offsets = [0, 0], sizes = [8, 32], strides = [1, 1]} : vector<16x32xf32> to vector<8x32xf32>
    %24 = arith.truncf %23 : vector<8x32xf32> to vector<8x32xbf16>
    %25 = vector.extract_strided_slice %20 {offsets = [0, 0], sizes = [8, 32], strides = [1, 1]} : vector<16x32xf32> to vector<8x32xf32>
    %26 = arith.truncf %25 : vector<8x32xf32> to vector<8x32xbf16>
    %cst_8 = arith.constant dense<0.000000e+00> : vector<8x8xf32>
    %27 = tpu.matmul %22, %24, %cst_8 {dimension_numbers = #tpu.dot_dimension_numbers<[1], [1], [0], [0], [0, 0, 1, 0], [], []>} : vector<8x32xbf16>, vector<8x32xbf16>, vector<8x8xf32> -> vector<8x8xf32>
    %cst_9 = arith.constant dense<0xFF800000> : vector<8xf32>
    %28 = vector.multi_reduction <maximumf>, %27, %cst_9 [1] : vector<8x8xf32> to vector<8xf32>
    %29 = vector.shape_cast %28 : vector<8xf32> to vector<8x1xf32>
    %30 = vector.broadcast %29 : vector<8x1xf32> to vector<8x8xf32>
    %31 = arith.subf %27, %30 : vector<8x8xf32>
    %32 = math.exp %31 : vector<8x8xf32>
    %cst_10 = arith.constant dense<0.000000e+00> : vector<8xf32>
    %33 = vector.multi_reduction <add>, %32, %cst_10 [1] : vector<8x8xf32> to vector<8xf32>
    %34 = vector.shape_cast %33 : vector<8xf32> to vector<8x1xf32>
    %35 = vector.broadcast %34 : vector<8x1xf32> to vector<8x8xf32>
    %36 = arith.divf %32, %35 : vector<8x8xf32>
    %37 = arith.truncf %36 : vector<8x8xf32> to vector<8x8xbf16>
    %cst_11 = arith.constant dense<0.000000e+00> : vector<8x32xf32>
    %38 = tpu.matmul %37, %26, %cst_11 {dimension_numbers = #tpu.dot_dimension_numbers<[1], [0], [0], [1], [0, 0, 1, 1], [], []>} : vector<8x8xbf16>, vector<8x32xbf16>, vector<8x32xf32> -> vector<8x32xf32>
    %39 = vector.extract_strided_slice %18 {offsets = [8, 0], sizes = [8, 32], strides = [1, 1]} : vector<16x32xf32> to vector<8x32xf32>
    %40 = arith.truncf %39 : vector<8x32xf32> to vector<8x32xbf16>
    %41 = vector.extract_strided_slice %19 {offsets = [8, 0], sizes = [8, 32], strides = [1, 1]} : vector<16x32xf32> to vector<8x32xf32>
    %42 = arith.truncf %41 : vector<8x32xf32> to vector<8x32xbf16>
    %43 = vector.extract_strided_slice %20 {offsets = [8, 0], sizes = [8, 32], strides = [1, 1]} : vector<16x32xf32> to vector<8x32xf32>
    %44 = arith.truncf %43 : vector<8x32xf32> to vector<8x32xbf16>
    %cst_12 = arith.constant dense<0.000000e+00> : vector<8x8xf32>
    %45 = tpu.matmul %40, %42, %cst_12 {dimension_numbers = #tpu.dot_dimension_numbers<[1], [1], [0], [0], [0, 0, 1, 0], [], []>} : vector<8x32xbf16>, vector<8x32xbf16>, vector<8x8xf32> -> vector<8x8xf32>
    %cst_13 = arith.constant dense<0xFF800000> : vector<8xf32>
    %46 = vector.multi_reduction <maximumf>, %45, %cst_13 [1] : vector<8x8xf32> to vector<8xf32>
    %47 = vector.shape_cast %46 : vector<8xf32> to vector<8x1xf32>
    %48 = vector.broadcast %47 : vector<8x1xf32> to vector<8x8xf32>
    %49 = arith.subf %45, %48 : vector<8x8xf32>
    %50 = math.exp %49 : vector<8x8xf32>
    %cst_14 = arith.constant dense<0.000000e+00> : vector<8xf32>
    %51 = vector.multi_reduction <add>, %50, %cst_14 [1] : vector<8x8xf32> to vector<8xf32>
    %52 = vector.shape_cast %51 : vector<8xf32> to vector<8x1xf32>
    %53 = vector.broadcast %52 : vector<8x1xf32> to vector<8x8xf32>
    %54 = arith.divf %50, %53 : vector<8x8xf32>
    %55 = arith.truncf %54 : vector<8x8xf32> to vector<8x8xbf16>
    %cst_15 = arith.constant dense<0.000000e+00> : vector<8x32xf32>
    %56 = tpu.matmul %55, %44, %cst_15 {dimension_numbers = #tpu.dot_dimension_numbers<[1], [0], [0], [1], [0, 0, 1, 1], [], []>} : vector<8x8xbf16>, vector<8x32xbf16>, vector<8x32xf32> -> vector<8x32xf32>
    %57 = tpu.concatenate %38, %56 in 0 : vector<8x32xf32>, vector<8x32xf32> -> vector<16x32xf32>
    %58 = arith.truncf %57 : vector<16x32xf32> to vector<16x32xbf16>
    %cst_16 = arith.constant dense<0.000000e+00> : vector<16x32xf32>
    %59 = tpu.matmul %58, %3, %cst_16 {dimension_numbers = #tpu.dot_dimension_numbers<[1], [0], [0], [1], [0, 0, 1, 1], [], []>} : vector<16x32xbf16>, vector<32x32xbf16>, vector<16x32xf32> -> vector<16x32xf32>
    %60 = vector.broadcast %7 : vector<1x32xf32> to vector<16x32xf32>
    %61 = arith.addf %59, %60 : vector<16x32xf32>
    %62 = arith.addf %0, %61 : vector<16x32xf32>
    %cst_17 = arith.constant dense<0.000000e+00> : vector<16xf32>
    %63 = vector.multi_reduction <add>, %62, %cst_17 [1] : vector<16x32xf32> to vector<16xf32>
    %64 = vector.shape_cast %63 : vector<16xf32> to vector<16x1xf32>
    %cst_18 = arith.constant 3.200000e+01 : f32
    %65 = vector.broadcast %cst_18 : f32 to vector<16x1xf32>
    %66 = arith.divf %64, %65 : vector<16x1xf32>
    %67 = vector.broadcast %66 : vector<16x1xf32> to vector<16x32xf32>
    %68 = arith.subf %62, %67 : vector<16x32xf32>
    %69 = arith.mulf %68, %68 : vector<16x32xf32>
    %cst_19 = arith.constant dense<0.000000e+00> : vector<16xf32>
    %70 = vector.multi_reduction <add>, %69, %cst_19 [1] : vector<16x32xf32> to vector<16xf32>
    %71 = vector.shape_cast %70 : vector<16xf32> to vector<16x1xf32>
    %cst_20 = arith.constant 3.200000e+01 : f32
    %72 = vector.broadcast %cst_20 : f32 to vector<16x1xf32>
    %73 = arith.divf %71, %72 : vector<16x1xf32>
    %cst_21 = arith.constant 9.99999974E-6 : f32
    %74 = vector.broadcast %cst_21 : f32 to vector<16x1xf32>
    %75 = arith.addf %73, %74 : vector<16x1xf32>
    %76 = math.rsqrt %75 : vector<16x1xf32>
    %77 = vector.broadcast %76 : vector<16x1xf32> to vector<16x32xf32>
    %78 = arith.mulf %68, %77 : vector<16x32xf32>
    %79 = vector.broadcast %10 : vector<1x32xf32> to vector<16x32xf32>
    %80 = arith.mulf %78, %79 : vector<16x32xf32>
    %81 = vector.broadcast %11 : vector<1x32xf32> to vector<16x32xf32>
    %82 = arith.addf %80, %81 : vector<16x32xf32>
    %83 = arith.truncf %82 : vector<16x32xf32> to vector<16x32xbf16>
    %cst_22 = arith.constant dense<0.000000e+00> : vector<16x128xf32>
    %84 = tpu.matmul %83, %4, %cst_22 {dimension_numbers = #tpu.dot_dimension_numbers<[1], [0], [0], [1], [0, 0, 1, 1], [], []>} : vector<16x32xbf16>, vector<32x128xbf16>, vector<16x128xf32> -> vector<16x128xf32>
    %85 = vector.broadcast %8 : vector<1x128xf32> to vector<16x128xf32>
    %86 = arith.addf %84, %85 : vector<16x128xf32>
    %cst_23 = arith.constant 0.000000e+00 : f32
    %87 = vector.broadcast %cst_23 : f32 to vector<16x128xf32>
    %88 = arith.maximumf %86, %87 : vector<16x128xf32>
    %89 = arith.truncf %88 : vector<16x128xf32> to vector<16x128xbf16>
    %cst_24 = arith.constant dense<0.000000e+00> : vector<16x32xf32>
    %90 = tpu.matmul %89, %5, %cst_24 {dimension_numbers = #tpu.dot_dimension_numbers<[1], [1], [0], [0], [0, 0, 1, 0], [], []>} : vector<16x128xbf16>, vector<32x128xbf16>, vector<16x32xf32> -> vector<16x32xf32>
    %91 = vector.broadcast %9 : vector<1x32xf32> to vector<16x32xf32>
    %92 = arith.addf %90, %91 : vector<16x32xf32>
    %93 = arith.addf %82, %92 : vector<16x32xf32>
    %cst_25 = arith.constant dense<0.000000e+00> : vector<16xf32>
    %94 = vector.multi_reduction <add>, %93, %cst_25 [1] : vector<16x32xf32> to vector<16xf32>
    %95 = vector.shape_cast %94 : vector<16xf32> to vector<16x1xf32>
    %cst_26 = arith.constant 3.200000e+01 : f32
    %96 = vector.broadcast %cst_26 : f32 to vector<16x1xf32>
    %97 = arith.divf %95, %96 : vector<16x1xf32>
    %98 = vector.broadcast %97 : vector<16x1xf32> to vector<16x32xf32>
    %99 = arith.subf %93, %98 : vector<16x32xf32>
    %100 = arith.mulf %99, %99 : vector<16x32xf32>
    %cst_27 = arith.constant dense<0.000000e+00> : vector<16xf32>
    %101 = vector.multi_reduction <add>, %100, %cst_27 [1] : vector<16x32xf32> to vector<16xf32>
    %102 = vector.shape_cast %101 : vector<16xf32> to vector<16x1xf32>
    %cst_28 = arith.constant 3.200000e+01 : f32
    %103 = vector.broadcast %cst_28 : f32 to vector<16x1xf32>
    %104 = arith.divf %102, %103 : vector<16x1xf32>
    %cst_29 = arith.constant 9.99999974E-6 : f32
    %105 = vector.broadcast %cst_29 : f32 to vector<16x1xf32>
    %106 = arith.addf %104, %105 : vector<16x1xf32>
    %107 = math.rsqrt %106 : vector<16x1xf32>
    %108 = vector.broadcast %107 : vector<16x1xf32> to vector<16x32xf32>
    %109 = arith.mulf %99, %108 : vector<16x32xf32>
    %110 = vector.broadcast %12 : vector<1x32xf32> to vector<16x32xf32>
    %111 = arith.mulf %109, %110 : vector<16x32xf32>
    %112 = vector.broadcast %13 : vector<1x32xf32> to vector<16x32xf32>
    %113 = arith.addf %111, %112 : vector<16x32xf32>
    %c0_30 = arith.constant 0 : index
    %c0_31 = arith.constant 0 : index
    %114 = vector.load %arg3[%c0_30, %c0_31] : memref<16x32xf32, #tpu.memory_space<vmem>>, vector<16x32xf32>
    tpu.vector_store %arg3[%c0_30, %c0_31], %113 {strides = array<i32>} : memref<16x32xf32, #tpu.memory_space<vmem>>, vector<16x32xf32>,
    return
  }
}

</mosaic_0001>

<llo_original>
// kernel: group_encoder_layer.1
$region0: #{group_encoder_layer.1}
  #allocation0 [shape = 'u32[]', space=smem, size = 0x4, offset = 0x4, fixed_abs, tag = 'smem constant byte address 0x4 - core index']
  #allocation1 [shape = 'u32[144,128]{1,0:T(1,128)}', space=vmem, size = 0x12000, scoped, tag = 'internal scratch']
  %s0 = inlined_call_operand.hbm [shape: f32[16,32], index: 0, kind: input, shape index: {}]
  %s1 = inlined_call_operand.hbm [shape: bf16[32,512], index: 1, kind: input, shape index: {}]
  %s2 = inlined_call_operand.hbm [shape: f32[8,128], index: 2, kind: input, shape index: {}]
  %s3 = inlined_call_operand.hbm [shape: f32[16,32], index: 3, kind: output, shape index: {}]
  %s4 = sld [smem:[#allocation0]]
  $region34: #{group_encoder_layer.1} parent=0
    _
  %s6 = ssub.s32 1, %s4
  %s7 = scalar_select 0, %s6, %s4
  $region1: #{group_encoder_layer.1} parent=0
    #allocation2 [shape = 'u8[8192]{0}', space=vmem, size = 0x2000, scoped, tag = 'input window, operand 0, single buffered']
    #allocation3 [shape = 's32[1]{0}', space=sflag, size = 0x4, scoped, tag = 'scoped memory for group_encoder_layer.1']
    #allocation4 [shape = 's32[1]{0}', space=sflag, size = 0x4, scoped, tag = 'scoped memory for group_encoder_layer.1']
    #allocation5 [shape = 'u8[32768]{0}', space=vmem, size = 0x8000, scoped, tag = 'input window, operand 1, single buffered']
    #allocation6 [shape = 's32[1]{0}', space=sflag, size = 0x4, scoped, tag = 'scoped memory for group_encoder_layer.1']
    #allocation7 [shape = 'u8[4096]{0}', space=vmem, size = 0x1000, scoped, tag = 'input window, operand 2, single buffered']
    #allocation8 [shape = 'u8[8192]{0}', space=vmem, size = 0x2000, scoped, tag = 'output window, operand 0, single buffered']
    %8 = vsyncpa [#allocation3], 0
    %9 = vsyncpa [#allocation6], 0
    %10 = vsyncpa [#allocation4], 0
    // Predicated region
    $region2: #{group_encoder_layer.1} parent=1 // pred_check
      _
    $region3: #{group_encoder_layer.1} parent=1 // pred_check_branch
      %12 = sbr.rel (0) target = $region5
    $region4: #{group_encoder_layer.1} parent=1 // pred_region
      %s14 = ssub.s32 256, 256
      %15 = vsyncadd [#allocation3], %s14
      %s16 = sshll.u32 [#allocation2], 4
      %s17 = int_to_ptr.vmem [resolvable:$true] %s16
      %22 = dma.hbm_to_vmem [thread:$0]  %s0, 256, %s17, [#allocation3], 128, 128, 8
    $region5: #{group_encoder_layer.1} parent=1 // pred_fallthru
      _
    // Predicated region
    $region6: #{group_encoder_layer.1} parent=1 // pred_check
      _
    $region7: #{group_encoder_layer.1} parent=1 // pred_check_branch
      %24 = sbr.rel (0) target = $region9
    $region8: #{group_encoder_layer.1} parent=1 // pred_region
      %s26 = ssub.s32 1024, 1024
      %27 = vsyncadd [#allocation6], %s26
      %s28 = sshll.u32 [#allocation5], 4
      %s29 = int_to_ptr.vmem [resolvable:$true] %s28
      %34 = dma.hbm_to_vmem [thread:$0]  %s1, 1024, %s29, [#allocation6], 256, 256, 16
    $region9: #{group_encoder_layer.1} parent=1 // pred_fallthru
      _
    // Predicated region
    $region10: #{group_encoder_layer.1} parent=1 // pred_check
      _
    $region11: #{group_encoder_layer.1} parent=1 // pred_check_branch
      %36 = sbr.rel (0) target = $region13
    $region12: #{group_encoder_layer.1} parent=1 // pred_region
      %s38 = ssub.s32 128, 128
      %39 = vsyncadd [#allocation6], %s38
      %s41 = sshll.u32 [#allocation7], 4
      %s42 = int_to_ptr.vmem [resolvable:$true] %s41
      %44 = dma.hbm_to_vmem [thread:$0]  %s2, 128, %s42, [#allocation6]
    $region13: #{group_encoder_layer.1} parent=1 // pred_fallthru
      _
    // Predicated region
    $region14: #{group_encoder_layer.1} parent=1 // pred_check
      _
    $region15: #{group_encoder_layer.1} parent=1 // pred_check_branch
      %46 = sbr.rel (0) target = $region17
    $region16: #{group_encoder_layer.1} parent=1 // pred_region
      %47 = dma.done [#allocation3], 256
    $region17: #{group_encoder_layer.1} parent=1 // pred_fallthru
      _
    // Predicated region
    $region18: #{group_encoder_layer.1} parent=1 // pred_check
      _
    $region19: #{group_encoder_layer.1} parent=1 // pred_check_branch
      %49 = sbr.rel (0) target = $region21
    $region20: #{group_encoder_layer.1} parent=1 // pred_region
      %50 = dma.done [#allocation6], 1024
    $region21: #{group_encoder_layer.1} parent=1 // pred_fallthru
      _
    // Predicated region
    $region22: #{group_encoder_layer.1} parent=1 // pred_check
      _
    $region23: #{group_encoder_layer.1} parent=1 // pred_check_branch
      %52 = sbr.rel (0) target = $region25
    $region24: #{group_encoder_layer.1} parent=1 // pred_region
      %53 = dma.done [#allocation6], 128
    $region25: #{group_encoder_layer.1} parent=1 // pred_fallthru
      _
    %v55 = vld [vmem:[#allocation2] sm:$0xff]
    %v56 = vld [vmem:[#allocation2 + $0x8] sm:$0xff]
    %v57 = vld [vmem:[#allocation7] sm:$0xff]
    %v58 = vld [vmem:[#allocation5] sm:$0xf]
    %v59 = vld [vmem:[#allocation5 + $0x10] sm:$0xf]
    %v60 = vld [vmem:[#allocation5 + $0x20] sm:$0xf]
    %v61 = vld [vmem:[#allocation5 + $0x30] sm:$0xf]
    %v62 = vld [vmem:[#allocation5 + $0x4] sm:$0xf]
    %v63 = vld [vmem:[#allocation5 + $0x14] sm:$0xf]
    %v64 = vld [vmem:[#allocation5 + $0x24] sm:$0xf]
    %v65 = vld [vmem:[#allocation5 + $0x34] sm:$0xf]
    %v66 = vld [vmem:[#allocation5 + $0x8] sm:$0xf]
    %v67 = vld [vmem:[#allocation5 + $0x18] sm:$0xf]
    %v68 = vld [vmem:[#allocation5 + $0x28] sm:$0xf]
    %v69 = vld [vmem:[#allocation5 + $0x38] sm:$0xf]
    %v70 = vld [vmem:[#allocation5 + $0xc] sm:$0xf]
    %v71 = vld [vmem:[#allocation5 + $0x1c] sm:$0xf]
    %v72 = vld [vmem:[#allocation5 + $0x2c] sm:$0xf]
    %v73 = vld [vmem:[#allocation5 + $0x3c] sm:$0xf]
    %v74 = vpack.c.bf16 %v56, %v55
    %v75 = vlaneseq
    %v76 = vshrl.u32 %v75, 7
    %v77 = vsub.s32 0, %v76
    %v78 = vrot.slane %v57, %v77
    %v83 = vunpack.c.l.b16 %v58
    %v84 = vunpack.c.l.b16 %v59
    %v85 = vunpack.c.l.b16 %v60
    %v86 = vunpack.c.l.b16 %v61
    %v87 = vpack.c.b16 %v84, %v83
    %v88 = vpack.c.b16 %v86, %v85
    %vm91 = vcmask 261120
    %v93 = vsel %vm91, %v74, 0
    %95 = vmatprep.subr.bf16.mxu0 0
    %96 = vmatpush1.bf16.msra.mxu0 0
    %97 = vmatprep.subr.bf16.mxu0 0
    %98 = vmatpush1.bf16.msra.mxu0 0
    %99 = vmatprep.subr.bf16.mxu0 0
    %100 = vmatpush1.bf16.msra.mxu0 0
    %101 = vmatprep.subr.bf16.mxu0 0
    %102 = vmatpush1.bf16.msra.mxu0 0
    %103 = vmatprep.subr.bf16.mxu0 0
    %104 = vmatpush1.bf16.msra.mxu0 0
    %105 = vmatprep.subr.bf16.mxu0 0
    %106 = vmatpush1.bf16.msra.mxu0 0
    %107 = vmatprep.subr.bf16.mxu0 0
    %108 = vmatpush1.bf16.msra.mxu0 %v88
    %109 = vmatprep.subr.bf16.mxu0 0
    %110 = vmatpush1.bf16.msra.mxu0 %v87
    %111 = vmatprep.subr.bf16.mxu0 0
    %112 = vmatpush2.bf16.msra.mxu0 0
    %113 = vmatprep.subr.bf16.mxu0 0
    %114 = vmatpush2.bf16.msra.mxu0 0
    %115 = vmatprep.subr.bf16.mxu0 0
    %116 = vmatpush2.bf16.msra.mxu0 0
    %117 = vmatprep.subr.bf16.mxu0 0
    %118 = vmatpush2.bf16.msra.mxu0 0
    %119 = vmatprep.subr.bf16.mxu0 0
    %120 = vmatpush2.bf16.msra.mxu0 0
    %121 = vmatprep.subr.bf16.mxu0 0
    %122 = vmatpush2.bf16.msra.mxu0 0
    %123 = vmatprep.subr.bf16.mxu0 0
    %124 = vmatpush2.bf16.msra.mxu0 0
    %125 = vmatprep.subr.bf16.mxu0 0
    %126 = vmatpush2.bf16.msra.mxu0 0
    %127 = vmatprep.mubr.bf16.mxu0 0
    %128 = vmatmul.mubr.bf16.gmra.mxu0 %v93
    %v129 = vpop.f32.mrf.mxu0
    %v130 = vadd.f32 %v78, %v129
    %v131 = vpop.f32.mrf.mxu0
    %v132 = vpop.f32.mrf.mxu0
    %v133 = vadd.f32 %v78, %v132
    %v134 = vpop.f32.mrf.mxu0
    %135 = vdwg.mxu0
    %v136 = vpack.c.bf16 %v130, %v130
    %138 = vrot.lane.b32.xlu0 %v136, 96
    %v139 = vpop.permute.xlu0 %138
    %v141 = vsel %vm91, %v136, 0
    %v144 = vsel %vm91, %v139, 0
    %146 = vmatprep.subr.bf16.mxu0 0
    %147 = vmatpush1.bf16.xpose.msra.mxu0 0
    %148 = vmatprep.subr.bf16.mxu0 0
    %149 = vmatpush1.bf16.xpose.msra.mxu0 0
    %150 = vmatprep.subr.bf16.mxu0 0
    %151 = vmatpush1.bf16.xpose.msra.mxu0 0
    %152 = vmatprep.subr.bf16.mxu0 0
    %153 = vmatpush1.bf16.xpose.msra.mxu0 0
    %154 = vmatprep.subr.bf16.mxu0 0
    %155 = vmatpush1.bf16.xpose.msra.mxu0 0
    %156 = vmatprep.subr.bf16.mxu0 0
    %157 = vmatpush1.bf16.xpose.msra.mxu0 0
    %158 = vmatprep.subr.bf16.mxu0 0
    %159 = vmatpush1.bf16.xpose.msra.mxu0 0
    %160 = vmatprep.subr.bf16.mxu0 0
    %161 = vmatpush1.bf16.xpose.msra.mxu0 %v144
    %162 = vmatprep.subr.bf16.mxu0 0
    %163 = vmatpush2.bf16.xpose.msra.mxu0 0
    %164 = vmatprep.subr.bf16.mxu0 0
    %165 = vmatpush2.bf16.xpose.msra.mxu0 0
    %166 = vmatprep.subr.bf16.mxu0 0
    %167 = vmatpush2.bf16.xpose.msra.mxu0 0
    %168 = vmatprep.subr.bf16.mxu0 0
    %169 = vmatpush2.bf16.xpose.msra.mxu0 0
    %170 = vmatprep.subr.bf16.mxu0 0
    %171 = vmatpush2.bf16.xpose.msra.mxu0 0
    %172 = vmatprep.subr.bf16.mxu0 0
    %173 = vmatpush2.bf16.xpose.msra.mxu0 0
    %174 = vmatprep.subr.bf16.mxu0 0
    %175 = vmatpush2.bf16.xpose.msra.mxu0 0
    %176 = vmatprep.subr.bf16.mxu0 0
    %177 = vmatpush2.bf16.xpose.msra.mxu0 0
    %178 = vmatprep.mubr.bf16.mxu0 0
    %179 = vmatmul.mubr.bf16.gmra.mxu0 %v141
    %v180 = vpop.f32.mrf.mxu0
    %v181 = vadd.f32 0.0, %v180
    %v182 = vpop.f32.mrf.mxu0
    %v183 = vpop.f32.mrf.mxu0
    %v184 = vpop.f32.mrf.mxu0
    %185 = vdwg.mxu0
    %vm186 = vcmask 64512
    %v187 = vsel %vm186, %v181, -inf
    %188 = vmax.xlane.f32.xlu0 %v187
    %v189 = vpop.xlane.xlu0 %188
    %v190 = vsub.f32 %v181, %v189
    %v191 = vmul.f32 %v190, 1.442695
    %v192 = vpow.pop %v191
    %v193 = vsel %vm186, %v192, 0.0
    %194 = vadd.xlane.f32.xlu0 %v193
    %v195 = vpop.xlane.xlu0 %194
    %v196 = vrcp.pop %v195
    %v197 = vmul.f32 %v192, %v196
    %v198 = vpack.c.bf16 %v197, %v197
    %199 = vrot.lane.b32.xlu0 %v136, 64
    %v200 = vpop.permute.xlu0 %199
    %v202 = vsel %vm186, %v198, 0
    %vm204 = vcmask 1043456
    %v206 = vsel %vm204, %v200, 0
    %208 = vmatprep.subr.bf16.mxu0 0
    %209 = vmatpush1.bf16.msra.mxu0 0
    %210 = vmatprep.subr.bf16.mxu0 0
    %211 = vmatpush1.bf16.msra.mxu0 0
    %212 = vmatprep.subr.bf16.mxu0 0
    %213 = vmatpush1.bf16.msra.mxu0 0
    %214 = vmatprep.subr.bf16.mxu0 0
    %215 = vmatpush1.bf16.msra.mxu0 0
    %216 = vmatprep.subr.bf16.mxu0 0
    %217 = vmatpush1.bf16.msra.mxu0 0
    %218 = vmatprep.subr.bf16.mxu0 0
    %219 = vmatpush1.bf16.msra.mxu0 0
    %220 = vmatprep.subr.bf16.mxu0 0
    %221 = vmatpush1.bf16.msra.mxu0 0
    %222 = vmatprep.subr.bf16.mxu0 0
    %223 = vmatpush1.bf16.msra.mxu0 %v206
    %224 = vmatprep.subr.bf16.mxu0 0
    %225 = vmatpush2.bf16.msra.mxu0 0
    %226 = vmatprep.subr.bf16.mxu0 0
    %227 = vmatpush2.bf16.msra.mxu0 0
    %228 = vmatprep.subr.bf16.mxu0 0
    %229 = vmatpush2.bf16.msra.mxu0 0
    %230 = vmatprep.subr.bf16.mxu0 0
    %231 = vmatpush2.bf16.msra.mxu0 0
    %232 = vmatprep.subr.bf16.mxu0 0
    %233 = vmatpush2.bf16.msra.mxu0 0
    %234 = vmatprep.subr.bf16.mxu0 0
    %235 = vmatpush2.bf16.msra.mxu0 0
    %236 = vmatprep.subr.bf16.mxu0 0
    %237 = vmatpush2.bf16.msra.mxu0 0
    %238 = vmatprep.subr.bf16.mxu0 0
    %239 = vmatpush2.bf16.msra.mxu0 0
    %240 = vmatprep.mubr.bf16.mxu0 0
    %241 = vmatmul.mubr.bf16.gmra.mxu0 %v202
    %v242 = vpop.f32.mrf.mxu0
    %v243 = vadd.f32 0.0, %v242
    %v244 = vpop.f32.mrf.mxu0
    %v245 = vpop.f32.mrf.mxu0
    %v246 = vpop.f32.mrf.mxu0
    %247 = vdwg.mxu0
    %v248 = vpack.c.bf16 %v133, %v133
    %250 = vrot.lane.b32.xlu0 %v248, 96
    %v251 = vpop.permute.xlu0 %250
    %v253 = vsel %vm91, %v248, 0
    %v256 = vsel %vm91, %v251, 0
    %258 = vmatprep.subr.bf16.mxu0 0
    %259 = vmatpush1.bf16.xpose.msra.mxu0 0
    %260 = vmatprep.subr.bf16.mxu0 0
    %261 = vmatpush1.bf16.xpose.msra.mxu0 0
    %262 = vmatprep.subr.bf16.mxu0 0
    %263 = vmatpush1.bf16.xpose.msra.mxu0 0
    %264 = vmatprep.subr.bf16.mxu0 0
    %265 = vmatpush1.bf16.xpose.msra.mxu0 0
    %266 = vmatprep.subr.bf16.mxu0 0
    %267 = vmatpush1.bf16.xpose.msra.mxu0 0
    %268 = vmatprep.subr.bf16.mxu0 0
    %269 = vmatpush1.bf16.xpose.msra.mxu0 0
    %270 = vmatprep.subr.bf16.mxu0 0
    %271 = vmatpush1.bf16.xpose.msra.mxu0 0
    %272 = vmatprep.subr.bf16.mxu0 0
    %273 = vmatpush1.bf16.xpose.msra.mxu0 %v256
    %274 = vmatprep.subr.bf16.mxu0 0
    %275 = vmatpush2.bf16.xpose.msra.mxu0 0
    %276 = vmatprep.subr.bf16.mxu0 0
    %277 = vmatpush2.bf16.xpose.msra.mxu0 0
    %278 = vmatprep.subr.bf16.mxu0 0
    %279 = vmatpush2.bf16.xpose.msra.mxu0 0
    %280 = vmatprep.subr.bf16.mxu0 0
    %281 = vmatpush2.bf16.xpose.msra.mxu0 0
    %282 = vmatprep.subr.bf16.mxu0 0
    %283 = vmatpush2.bf16.xpose.msra.mxu0 0
    %284 = vmatprep.subr.bf16.mxu0 0
    %285 = vmatpush2.bf16.xpose.msra.mxu0 0
    %286 = vmatprep.subr.bf16.mxu0 0
    %287 = vmatpush2.bf16.xpose.msra.mxu0 0
    %288 = vmatprep.subr.bf16.mxu0 0
    %289 = vmatpush2.bf16.xpose.msra.mxu0 0
    %290 = vmatprep.mubr.bf16.mxu0 0
    %291 = vmatmul.mubr.bf16.gmra.mxu0 %v253
    %v292 = vpop.f32.mrf.mxu0
    %v293 = vadd.f32 0.0, %v292
    %v294 = vpop.f32.mrf.mxu0
    %v295 = vpop.f32.mrf.mxu0
    %v296 = vpop.f32.mrf.mxu0
    %297 = vdwg.mxu0
    %v298 = vsel %vm186, %v293, -inf
    %299 = vmax.xlane.f32.xlu0 %v298
    %v300 = vpop.xlane.xlu0 %299
    %v301 = vsub.f32 %v293, %v300
    %v302 = vmul.f32 %v301, 1.442695
    %v303 = vpow.pop %v302
    %v304 = vsel %vm186, %v303, 0.0
    %305 = vadd.xlane.f32.xlu0 %v304
    %v306 = vpop.xlane.xlu0 %305
    %v307 = vrcp.pop %v306
    %v308 = vmul.f32 %v303, %v307
    %v309 = vpack.c.bf16 %v308, %v308
    %310 = vrot.lane.b32.xlu0 %v248, 64
    %v311 = vpop.permute.xlu0 %310
    %v313 = vsel %vm186, %v309, 0
    %v316 = vsel %vm204, %v311, 0
    %318 = vmatprep.subr.bf16.mxu0 0
    %319 = vmatpush1.bf16.msra.mxu0 0
    %320 = vmatprep.subr.bf16.mxu0 0
    %321 = vmatpush1.bf16.msra.mxu0 0
    %322 = vmatprep.subr.bf16.mxu0 0
    %323 = vmatpush1.bf16.msra.mxu0 0
    %324 = vmatprep.subr.bf16.mxu0 0
    %325 = vmatpush1.bf16.msra.mxu0 0
    %326 = vmatprep.subr.bf16.mxu0 0
    %327 = vmatpush1.bf16.msra.mxu0 0
    %328 = vmatprep.subr.bf16.mxu0 0
    %329 = vmatpush1.bf16.msra.mxu0 0
    %330 = vmatprep.subr.bf16.mxu0 0
    %331 = vmatpush1.bf16.msra.mxu0 0
    %332 = vmatprep.subr.bf16.mxu0 0
    %333 = vmatpush1.bf16.msra.mxu0 %v316
    %334 = vmatprep.subr.bf16.mxu0 0
    %335 = vmatpush2.bf16.msra.mxu0 0
    %336 = vmatprep.subr.bf16.mxu0 0
    %337 = vmatpush2.bf16.msra.mxu0 0
    %338 = vmatprep.subr.bf16.mxu0 0
    %339 = vmatpush2.bf16.msra.mxu0 0
    %340 = vmatprep.subr.bf16.mxu0 0
    %341 = vmatpush2.bf16.msra.mxu0 0
    %342 = vmatprep.subr.bf16.mxu0 0
    %343 = vmatpush2.bf16.msra.mxu0 0
    %344 = vmatprep.subr.bf16.mxu0 0
    %345 = vmatpush2.bf16.msra.mxu0 0
    %346 = vmatprep.subr.bf16.mxu0 0
    %347 = vmatpush2.bf16.msra.mxu0 0
    %348 = vmatprep.subr.bf16.mxu0 0
    %349 = vmatpush2.bf16.msra.mxu0 0
    %350 = vmatprep.mubr.bf16.mxu0 0
    %351 = vmatmul.mubr.bf16.gmra.mxu0 %v313
    %v352 = vpop.f32.mrf.mxu0
    %v353 = vadd.f32 0.0, %v352
    %v354 = vpop.f32.mrf.mxu0
    %v355 = vpop.f32.mrf.mxu0
    %v356 = vpop.f32.mrf.mxu0
    %357 = vdwg.mxu0
    %v358 = vpack.c.bf16 %v353, %v243
    %v359 = vlaneseq
    %v360 = vshrl.u32 %v359, 7
    %v361 = vsub.s32 1, %v360
    %v362 = vrot.slane %v57, %v361
    %v367 = vunpack.c.l.b16 %v62
    %v368 = vunpack.c.l.b16 %v63
    %v369 = vunpack.c.l.b16 %v64
    %v370 = vunpack.c.l.b16 %v65
    %v371 = vpack.c.b16 %v368, %v367
    %v372 = vpack.c.b16 %v370, %v369
    %v376 = vsel %vm91, %v358, 0
    %378 = vmatprep.subr.bf16.mxu0 0
    %379 = vmatpush1.bf16.msra.mxu0 0
    %380 = vmatprep.subr.bf16.mxu0 0
    %381 = vmatpush1.bf16.msra.mxu0 0
    %382 = vmatprep.subr.bf16.mxu0 0
    %383 = vmatpush1.bf16.msra.mxu0 0
    %384 = vmatprep.subr.bf16.mxu0 0
    %385 = vmatpush1.bf16.msra.mxu0 0
    %386 = vmatprep.subr.bf16.mxu0 0
    %387 = vmatpush1.bf16.msra.mxu0 0
    %388 = vmatprep.subr.bf16.mxu0 0
    %389 = vmatpush1.bf16.msra.mxu0 0
    %390 = vmatprep.subr.bf16.mxu0 0
    %391 = vmatpush1.bf16.msra.mxu0 %v372
    %392 = vmatprep.subr.bf16.mxu0 0
    %393 = vmatpush1.bf16.msra.mxu0 %v371
    %394 = vmatprep.subr.bf16.mxu0 0
    %395 = vmatpush2.bf16.msra.mxu0 0
    %396 = vmatprep.subr.bf16.mxu0 0
    %397 = vmatpush2.bf16.msra.mxu0 0
    %398 = vmatprep.subr.bf16.mxu0 0
    %399 = vmatpush2.bf16.msra.mxu0 0
    %400 = vmatprep.subr.bf16.mxu0 0
    %401 = vmatpush2.bf16.msra.mxu0 0
    %402 = vmatprep.subr.bf16.mxu0 0
    %403 = vmatpush2.bf16.msra.mxu0 0
    %404 = vmatprep.subr.bf16.mxu0 0
    %405 = vmatpush2.bf16.msra.mxu0 0
    %406 = vmatprep.subr.bf16.mxu0 0
    %407 = vmatpush2.bf16.msra.mxu0 0
    %408 = vmatprep.subr.bf16.mxu0 0
    %409 = vmatpush2.bf16.msra.mxu0 0
    %410 = vmatprep.mubr.bf16.mxu0 0
    %411 = vmatmul.mubr.bf16.gmra.mxu0 %v376
    %v412 = vpop.f32.mrf.mxu0
    %v413 = vadd.f32 %v362, %v412
    %v414 = vpop.f32.mrf.mxu0
    %v415 = vpop.f32.mrf.mxu0
    %v416 = vadd.f32 %v362, %v415
    %v417 = vpop.f32.mrf.mxu0
    %418 = vdwg.mxu0
    %v419 = vadd.f32 %v55, %v413
    %v420 = vadd.f32 %v56, %v416
    %v421 = vsel %vm91, %v419, 0.0
    %422 = vadd.xlane.f32.xlu0 %v421
    %v423 = vpop.xlane.xlu0 %422
    %v424 = vsel %vm91, %v420, 0.0
    %425 = vadd.xlane.f32.xlu0 %v424
    %v426 = vpop.xlane.xlu0 %425
    %v427 = vrcp.pop 32.0
    %v428 = vmul.f32 %v423, %v427
    %v429 = vmul.f32 %v426, %v427
    %v430 = vsub.f32 %v419, %v428
    %v431 = vsub.f32 %v420, %v429
    %v432 = vmul.f32 %v430, %v430
    %v433 = vmul.f32 %v431, %v431
    %v434 = vsel %vm91, %v432, 0.0
    %435 = vadd.xlane.f32.xlu0 %v434
    %v436 = vpop.xlane.xlu0 %435
    %v437 = vsel %vm91, %v433, 0.0
    %438 = vadd.xlane.f32.xlu0 %v437
    %v439 = vpop.xlane.xlu0 %438
    %v440 = vmul.f32 %v436, %v427
    %v441 = vmul.f32 %v439, %v427
    %v442 = vadd.f32 %v440, 1e-05
    %v443 = vadd.f32 %v441, 1e-05
    %v444 = vrsqrt.pop %v442
    %v445 = vrsqrt.pop %v443
    %v446 = vmul.f32 %v430, %v444
    %v447 = vmul.f32 %v431, %v445
    %v448 = vlaneseq
    %v449 = vshrl.u32 %v448, 7
    %v450 = vsub.s32 4, %v449
    %v451 = vrot.slane %v57, %v450
    %v452 = vmul.f32 %v446, %v451
    %v453 = vmul.f32 %v447, %v451
    %v454 = vlaneseq
    %v455 = vshrl.u32 %v454, 7
    %v456 = vsub.s32 5, %v455
    %v457 = vrot.slane %v57, %v456
    %v458 = vadd.f32 %v452, %v457
    %v459 = vadd.f32 %v453, %v457
    %v460 = vpack.c.bf16 %v459, %v458
    %v461 = vlaneseq
    %v462 = vshrl.u32 %v461, 7
    %v463 = vsub.s32 2, %v462
    %v464 = vrot.slane %v57, %v463
    %v469 = vunpack.c.l.b16 %v66
    %v470 = vunpack.c.l.b16 %v67
    %v471 = vunpack.c.l.b16 %v68
    %v472 = vunpack.c.l.b16 %v69
    %v473 = vpack.c.b16 %v470, %v469
    %v474 = vpack.c.b16 %v472, %v471
    %v478 = vsel %vm91, %v460, 0
    %480 = vmatprep.subr.bf16.mxu0 0
    %481 = vmatpush1.bf16.msra.mxu0 0
    %482 = vmatprep.subr.bf16.mxu0 0
    %483 = vmatpush1.bf16.msra.mxu0 0
    %484 = vmatprep.subr.bf16.mxu0 0
    %485 = vmatpush1.bf16.msra.mxu0 0
    %486 = vmatprep.subr.bf16.mxu0 0
    %487 = vmatpush1.bf16.msra.mxu0 0
    %488 = vmatprep.subr.bf16.mxu0 0
    %489 = vmatpush1.bf16.msra.mxu0 0
    %490 = vmatprep.subr.bf16.mxu0 0
    %491 = vmatpush1.bf16.msra.mxu0 0
    %492 = vmatprep.subr.bf16.mxu0 0
    %493 = vmatpush1.bf16.msra.mxu0 %v474
    %494 = vmatprep.subr.bf16.mxu0 0
    %495 = vmatpush1.bf16.msra.mxu0 %v473
    %496 = vmatprep.subr.bf16.mxu0 0
    %497 = vmatpush2.bf16.msra.mxu0 0
    %498 = vmatprep.subr.bf16.mxu0 0
    %499 = vmatpush2.bf16.msra.mxu0 0
    %500 = vmatprep.subr.bf16.mxu0 0
    %501 = vmatpush2.bf16.msra.mxu0 0
    %502 = vmatprep.subr.bf16.mxu0 0
    %503 = vmatpush2.bf16.msra.mxu0 0
    %504 = vmatprep.subr.bf16.mxu0 0
    %505 = vmatpush2.bf16.msra.mxu0 0
    %506 = vmatprep.subr.bf16.mxu0 0
    %507 = vmatpush2.bf16.msra.mxu0 0
    %508 = vmatprep.subr.bf16.mxu0 0
    %509 = vmatpush2.bf16.msra.mxu0 0
    %510 = vmatprep.subr.bf16.mxu0 0
    %511 = vmatpush2.bf16.msra.mxu0 0
    %512 = vmatprep.mubr.bf16.mxu0 0
    %513 = vmatmul.mubr.bf16.gmra.mxu0 %v478
    %v514 = vpop.f32.mrf.mxu0
    %v515 = vadd.f32 %v464, %v514
    %v516 = vpop.f32.mrf.mxu0
    %v517 = vpop.f32.mrf.mxu0
    %v518 = vadd.f32 %v464, %v517
    %v519 = vpop.f32.mrf.mxu0
    %520 = vdwg.mxu0
    %v521 = vmax.f32 %v515, 0.0
    %v522 = vmax.f32 %v518, 0.0
    %v523 = vpack.c.bf16 %v522, %v521
    %v524 = vlaneseq
    %v525 = vshrl.u32 %v524, 7
    %v526 = vsub.s32 3, %v525
    %v527 = vrot.slane %v57, %v526
    %v532 = vunpack.c.l.b16 %v70
    %v533 = vunpack.c.l.b16 %v71
    %v534 = vunpack.c.l.b16 %v72
    %v535 = vunpack.c.l.b16 %v73
    %v536 = vpack.c.b16 %v533, %v532
    %v537 = vpack.c.b16 %v535, %v534
    %540 = vmatprep.subr.bf16.mxu0 0
    %541 = vmatpush1.bf16.xpose.msra.mxu0 0
    %542 = vmatprep.subr.bf16.mxu0 0
    %543 = vmatpush1.bf16.xpose.msra.mxu0 0
    %544 = vmatprep.subr.bf16.mxu0 0
    %545 = vmatpush1.bf16.xpose.msra.mxu0 0
    %546 = vmatprep.subr.bf16.mxu0 0
    %547 = vmatpush1.bf16.xpose.msra.mxu0 0
    %548 = vmatprep.subr.bf16.mxu0 0
    %549 = vmatpush1.bf16.xpose.msra.mxu0 0
    %550 = vmatprep.subr.bf16.mxu0 0
    %551 = vmatpush1.bf16.xpose.msra.mxu0 0
    %552 = vmatprep.subr.bf16.mxu0 0
    %553 = vmatpush1.bf16.xpose.msra.mxu0 %v537
    %554 = vmatprep.subr.bf16.mxu0 0
    %555 = vmatpush1.bf16.xpose.msra.mxu0 %v536
    %556 = vmatprep.subr.bf16.mxu0 0
    %557 = vmatpush2.bf16.xpose.msra.mxu0 0
    %558 = vmatprep.subr.bf16.mxu0 0
    %559 = vmatpush2.bf16.xpose.msra.mxu0 0
    %560 = vmatprep.subr.bf16.mxu0 0
    %561 = vmatpush2.bf16.xpose.msra.mxu0 0
    %562 = vmatprep.subr.bf16.mxu0 0
    %563 = vmatpush2.bf16.xpose.msra.mxu0 0
    %564 = vmatprep.subr.bf16.mxu0 0
    %565 = vmatpush2.bf16.xpose.msra.mxu0 0
    %566 = vmatprep.subr.bf16.mxu0 0
    %567 = vmatpush2.bf16.xpose.msra.mxu0 0
    %568 = vmatprep.subr.bf16.mxu0 0
    %569 = vmatpush2.bf16.xpose.msra.mxu0 0
    %570 = vmatprep.subr.bf16.mxu0 0
    %571 = vmatpush2.bf16.xpose.msra.mxu0 0
    %572 = vmatprep.mubr.bf16.mxu0 0
    %573 = vmatmul.mubr.bf16.gmra.mxu0 %v523
    %v574 = vpop.f32.mrf.mxu0
    %v575 = vadd.f32 %v527, %v574
    %v576 = vpop.f32.mrf.mxu0
    %v577 = vpop.f32.mrf.mxu0
    %v578 = vadd.f32 %v527, %v577
    %v579 = vpop.f32.mrf.mxu0
    %580 = vdwg.mxu0
    %v581 = vadd.f32 %v458, %v575
    %v582 = vadd.f32 %v459, %v578
    %v583 = vsel %vm91, %v581, 0.0
    %584 = vadd.xlane.f32.xlu0 %v583
    %v585 = vpop.xlane.xlu0 %584
    %v586 = vsel %vm91, %v582, 0.0
    %587 = vadd.xlane.f32.xlu0 %v586
    %v588 = vpop.xlane.xlu0 %587
    %v589 = vmul.f32 %v585, %v427
    %v590 = vmul.f32 %v588, %v427
    %v591 = vsub.f32 %v581, %v589
    %v592 = vsub.f32 %v582, %v590
    %v593 = vmul.f32 %v591, %v591
    %v594 = vmul.f32 %v592, %v592
    %v595 = vsel %vm91, %v593, 0.0
    %596 = vadd.xlane.f32.xlu0 %v595
    %v597 = vpop.xlane.xlu0 %596
    %v598 = vsel %vm91, %v594, 0.0
    %599 = vadd.xlane.f32.xlu0 %v598
    %v600 = vpop.xlane.xlu0 %599
    %v601 = vmul.f32 %v597, %v427
    %v602 = vmul.f32 %v600, %v427
    %v603 = vadd.f32 %v601, 1e-05
    %v604 = vadd.f32 %v602, 1e-05
    %v605 = vrsqrt.pop %v603
    %v606 = vrsqrt.pop %v604
    %v607 = vmul.f32 %v591, %v605
    %v608 = vmul.f32 %v592, %v606
    %v609 = vlaneseq
    %v610 = vshrl.u32 %v609, 7
    %v611 = vsub.s32 6, %v610
    %v612 = vrot.slane %v57, %v611
    %v613 = vmul.f32 %v607, %v612
    %v614 = vmul.f32 %v608, %v612
    %v615 = vlaneseq
    %v616 = vshrl.u32 %v615, 7
    %v617 = vsub.s32 7, %v616
    %v618 = vrot.slane %v57, %v617
    %v619 = vadd.f32 %v613, %v618
    %v620 = vadd.f32 %v614, %v618
    %621 = vst.msk [vmem:[#allocation8] sm:$0xff] %vm91, %v619
    %622 = vst.msk [vmem:[#allocation8 + $0x8] sm:$0xff] %vm91, %v620
    // Predicated region
    $region26: #{group_encoder_layer.1} parent=1 // pred_check
      _
    $region27: #{group_encoder_layer.1} parent=1 // pred_check_branch
      %624 = sbr.rel (0) target = $region29
    $region28: #{group_encoder_layer.1} parent=1 // pred_region
      %s626 = ssub.s32 256, 256
      %627 = vsyncadd [#allocation4], %s626
      %s628 = sshll.u32 [#allocation8], 4
      %s629 = int_to_ptr.vmem [resolvable:$true] %s628
      %634 = dma.vmem_to_hbm [thread:$0]  %s629, 256, %s3, [#allocation4], 128, 128, 8
    $region29: #{group_encoder_layer.1} parent=1 // pred_fallthru
      _
    // Predicated region
    $region30: #{group_encoder_layer.1} parent=1 // pred_check
      _
    $region31: #{group_encoder_layer.1} parent=1 // pred_check_branch
      %636 = sbr.rel (0) target = $region33
    $region32: #{group_encoder_layer.1} parent=1 // pred_region
      %637 = dma.done [#allocation4], 256
    $region33: #{group_encoder_layer.1} parent=1 // pred_fallthru
      _
    %638 = vsyncpa [#allocation3], 1
    %639 = vsyncpa [#allocation6], 1
    %640 = vsyncpa [#allocation4], 1

</llo_original>
